<compile_context>
chip_gen: v6e
topology: v6e:2x2x1
jax: 0.10.0
libtpu: 0.0.40
codegen_flags: <defaults>
</compile_context>

<pallas_src>
import functools

import jax
import jax.numpy as jnp
from jax.experimental import pallas as pl
from jax.experimental.pallas import tpu as pltpu


def _cdiv(a: int, b: int) -> int:
    return -(-a // b)


def _round_up(a: int, b: int) -> int:
    return _cdiv(a, b) * b


def _sublane(dtype) -> int:
    """Second-to-last-dim tiling granularity for the element width."""
    return {4: 8, 2: 16, 1: 32}.get(jnp.dtype(dtype).itemsize, 8)


@functools.lru_cache(maxsize=None)
def _vmem_params():
    """(block_budget_bytes, vmem_limit_bytes), derived from the chip's VMEM."""
    cap = 64 * 1024 * 1024
    try:
        info = pltpu.get_tpu_info()
        cap = int(getattr(info, "vmem_capacity_bytes", cap) or cap)
    except Exception:
        pass
    # 128 MiB parts (v5e/v6e): limit 96 MiB, budget 48 MiB.
    #  64 MiB parts (v7x)    : limit 48 MiB, budget 24 MiB.
    limit = min(cap * 3 // 4, 96 * 1024 * 1024)
    return limit // 2, limit


# ----------------------------------------------------------------------------
# Kernels
# ----------------------------------------------------------------------------
def _bn3d_fused_kernel(x_ref, w_ref, o_ref, *, eps: float, unroll: bool):
    # x_ref: (N, C_T, L)   w_ref: (C_T, 1) f32   o_ref: (N, C_T, L)
    n, c_t, l = x_ref.shape
    inv_count = 1.0 / float(n * l)

    # Per-channel sum over N slabs (only one (C_T, L) f32 slab live at a time).
    def sum_body(i, acc):
        return acc + jnp.sum(x_ref[i].astype(jnp.float32), axis=1, keepdims=True)

    total = jax.lax.fori_loop(0, n, sum_body,
                              jnp.zeros((c_t, 1), jnp.float32), unroll=unroll)
    mean = total * inv_count                                      # (C_T, 1)

    # Centered sum of squares (numerically robust variance).
    def sq_body(i, acc):
        d = x_ref[i].astype(jnp.float32) - mean
        return acc + jnp.sum(d * d, axis=1, keepdims=True)

    sq = jax.lax.fori_loop(0, n, sq_body,
                           jnp.zeros((c_t, 1), jnp.float32), unroll=unroll)
    var = sq * inv_count
    # Fold the affine weight into the inverse std: one multiply per element.
    scale = jax.lax.rsqrt(var + eps) * w_ref[...]                 # (C_T, 1)

    def write_body(i, carry):
        o_ref[i] = (x_ref[i].astype(jnp.float32) * scale).astype(o_ref.dtype)
        return carry

    jax.lax.fori_loop(0, n, write_body, 0, unroll=unroll)


def _bn3d_stats_kernel(x_ref, sum_ref, sq_ref, *,
                       n_total: int, l_total: int, mask_n: bool, mask_l: bool):
    # Pass 1 of the two-pass path: accumulate per-channel sum / sumsq.
    # x_ref: (N_T, C_T, L_T); sum_ref/sq_ref: (C_T, 1) f32, resident across
    # the (N, L) reduction axes (block index depends only on the C-tile axis).
    j = pl.program_id(1)
    k = pl.program_id(2)

    @pl.when((j == 0) & (k == 0))
    def _init():
        sum_ref[...] = jnp.zeros_like(sum_ref)
        sq_ref[...] = jnp.zeros_like(sq_ref)

    x = x_ref[...].astype(jnp.float32)
    if mask_n or mask_l:
        shp = x_ref.shape
        mask = None
        if mask_n:
            rows = jax.lax.broadcasted_iota(jnp.int32, shp, 0) + j * shp[0]
            mask = rows < n_total
        if mask_l:
            lanes = jax.lax.broadcasted_iota(jnp.int32, shp, 2) + k * shp[2]
            lmask = lanes < l_total
            mask = lmask if mask is None else (mask & lmask)
        x = jnp.where(mask, x, 0.0)

    ps = jnp.sum(jnp.sum(x, axis=2, keepdims=True), axis=0)        # (C_T, 1)
    pq = jnp.sum(jnp.sum(x * x, axis=2, keepdims=True), axis=0)    # (C_T, 1)
    sum_ref[...] += ps
    sq_ref[...] += pq


def _bn3d_scale_kernel(x_ref, s_ref, o_ref):
    # Pass 2: elementwise scale with per-channel scale = weight*rsqrt(var+eps).
    s = s_ref[...][None, :, :]                                     # (1, C_T, 1)
    o_ref[...] = (x_ref[...].astype(jnp.float32) * s).astype(o_ref.dtype)


def _bn2d_fused_kernel(x_ref, w_ref, o_ref, *, eps: float):
    # x_ref: (N, C_T)   w_ref: (1, C_T) f32   o_ref: (N, C_T)
    n = x_ref.shape[0]
    inv_count = 1.0 / float(n)
    x = x_ref[...].astype(jnp.float32)
    mean = jnp.sum(x, axis=0, keepdims=True) * inv_count
    d = x - mean
    var = jnp.sum(d * d, axis=0, keepdims=True) * inv_count
    scale = jax.lax.rsqrt(var + eps) * w_ref[...]
    o_ref[...] = (x * scale).astype(o_ref.dtype)


def _bn2d_stats_kernel(x_ref, sum_ref, sq_ref, *, n_total: int, mask_n: bool):
    # x_ref: (N_T, C_T); sum_ref/sq_ref: (1, C_T) f32 (lane-dense, resident).
    j = pl.program_id(1)

    @pl.when(j == 0)
    def _init():
        sum_ref[...] = jnp.zeros_like(sum_ref)
        sq_ref[...] = jnp.zeros_like(sq_ref)

    x = x_ref[...].astype(jnp.float32)
    if mask_n:
        rows = jax.lax.broadcasted_iota(jnp.int32, x_ref.shape, 0) + j * x_ref.shape[0]
        x = jnp.where(rows < n_total, x, 0.0)
    sum_ref[...] += jnp.sum(x, axis=0, keepdims=True)
    sq_ref[...] += jnp.sum(x * x, axis=0, keepdims=True)


def _bn2d_scale_kernel(x_ref, s_ref, o_ref):
    o_ref[...] = (x_ref[...].astype(jnp.float32) * s_ref[...]).astype(o_ref.dtype)


# ----------------------------------------------------------------------------
# Wrappers
# ----------------------------------------------------------------------------
def _bn3d(x, weight, eps, budget, vmem_limit):
    n, c, l = x.shape
    sub = _sublane(x.dtype)
    itemsize = jnp.dtype(x.dtype).itemsize
    w = weight.astype(jnp.float32).reshape(c, 1)

    # ---------------- fused single pass: block = (N, C_T, L) ----------------
    bpe_fused = 4 * itemsize + 8            # dbl-buffered in+out + slab temps
    row_bytes = max(1, n * l * bpe_fused)   # footprint of one channel's rows
    c_fit = budget // row_bytes
    if c_fit >= min(c, sub):
        if c <= sub:
            c_t = c                          # cannot split below sublane group
        else:
            c_cap = max(sub, (c_fit // sub) * sub)
            # >=2 (even-target) tiles: pipelining + v7x 2-TC sharding.
            target = max(2, min(8, c // sub))
            if target % 2:
                target += 1
            c_t = min(c_cap, _round_up(_cdiv(c, target), sub))
        grid_c = _cdiv(c, c_t)
        unroll = bool(n <= 16)
        return pl.pallas_call(
            functools.partial(_bn3d_fused_kernel, eps=eps, unroll=unroll),
            out_shape=jax.ShapeDtypeStruct((n, c, l), x.dtype),
            grid=(grid_c,),
            in_specs=[
                pl.BlockSpec((n, c_t, l), lambda i: (0, i, 0)),
                pl.BlockSpec((c_t, 1), lambda i: (i, 0)),
            ],
            out_specs=pl.BlockSpec((n, c_t, l), lambda i: (0, i, 0)),
            compiler_params=pltpu.CompilerParams(
                dimension_semantics=("parallel",),
                vmem_limit_bytes=vmem_limit,
            ),
        )(x, w)

    # ---------------- two-pass path: stats pass + scale pass ----------------
    bpe = 4 * itemsize + 12
    elem_budget = max(1, budget // bpe)

    # Tile priority: grow L first (long contiguous rows), then C, then N.
    if l <= 128 or sub * l <= elem_budget:
        l_t = l
    else:
        l_t = (elem_budget // sub) // 128 * 128
        if l_t >= 512:
            l_t = l_t // 512 * 512
        l_t = max(l_t, 128)
        if l_t >= l:
            l_t = l
    if c <= sub:
        c_t = c
    else:
        c_room = max(sub, (max(1, elem_budget // l_t) // sub) * sub)
        c_t = min(c_room, _round_up(_cdiv(c, 2), sub))   # keep >=2 C tiles
    n_t = max(1, min(n, elem_budget // (l_t * c_t)))

    grid = (_cdiv(c, c_t), _cdiv(n, n_t), _cdiv(l, l_t))
    mask_n = (n % n_t) != 0
    mask_l = (l % l_t) != 0

    x_spec = pl.BlockSpec((n_t, c_t, l_t), lambda i, j, k: (j, i, k))
    stat_spec = pl.BlockSpec((c_t, 1), lambda i, j, k: (i, 0))

    s, sq = pl.pallas_call(
        functools.partial(_bn3d_stats_kernel, n_total=n, l_total=l,
                          mask_n=mask_n, mask_l=mask_l),
        out_shape=(jax.ShapeDtypeStruct((c, 1), jnp.float32),
                   jax.ShapeDtypeStruct((c, 1), jnp.float32)),
        grid=grid,
        in_specs=[x_spec],
        out_specs=(stat_spec, stat_spec),
        compiler_params=pltpu.CompilerParams(
            dimension_semantics=("parallel", "arbitrary", "arbitrary"),
            vmem_limit_bytes=vmem_limit,
        ),
    )(x)

    # Finalize tiny per-channel stats in plain JAX (negligible cost).
    count = float(n * l)
    mean = s / count
    var = jnp.maximum(sq / count - mean * mean, 0.0)
    scale = w * jax.lax.rsqrt(var + eps)                           # (C, 1) f32

    return pl.pallas_call(
        _bn3d_scale_kernel,
        out_shape=jax.ShapeDtypeStruct((n, c, l), x.dtype),
        grid=grid,
        in_specs=[x_spec, stat_spec],
        out_specs=x_spec,
        compiler_params=pltpu.CompilerParams(
            dimension_semantics=("parallel", "parallel", "parallel"),
            vmem_limit_bytes=vmem_limit,
        ),
    )(x, scale)


def _bn2d(x, weight, eps, budget, vmem_limit):
    n, c = x.shape
    itemsize = jnp.dtype(x.dtype).itemsize
    w = weight.astype(jnp.float32).reshape(1, c)

    # ---------------- fused single pass: block = (N, C_T) -------------------
    bpe_fused = 4 * itemsize + 16
    col_bytes = max(1, n * bpe_fused)
    c_fit = budget // col_bytes
    if c_fit >= min(c, 128):
        if c <= 128:
            c_t = c
        else:
            c_cap = max(128, (c_fit // 128) * 128)
            target = max(2, min(8, c // 128))
            if target % 2:
                target += 1
            c_t = min(c_cap, _round_up(_cdiv(c, target), 128))
        return pl.pallas_call(
            functools.partial(_bn2d_fused_kernel, eps=eps),
            out_shape=jax.ShapeDtypeStruct((n, c), x.dtype),
            grid=(_cdiv(c, c_t),),
            in_specs=[pl.BlockSpec((n, c_t), lambda i: (0, i)),
                      pl.BlockSpec((1, c_t), lambda i: (0, i))],
            out_specs=pl.BlockSpec((n, c_t), lambda i: (0, i)),
            compiler_params=pltpu.CompilerParams(
                dimension_semantics=("parallel",),
                vmem_limit_bytes=vmem_limit,
            ),
        )(x, w)

    # ---------------- two-pass N-tiled fallback ------------------------------
    bpe = 4 * itemsize + 12
    elem_budget = max(1, budget // bpe)
    if c <= 128 or 8 * c <= elem_budget:
        c_t = c
    else:
        c_t = max(128, (elem_budget // 8) // 128 * 128)
        if c_t >= c:
            c_t = c
    n_room = max(1, elem_budget // c_t)
    if n_room >= n or n < 8:
        n_t = n
    else:
        n_t = max(8, (n_room // 8) * 8)
        if n_t >= n:
            n_t = n

    grid = (_cdiv(c, c_t), _cdiv(n, n_t))
    mask_n = (n % n_t) != 0

    x_spec = pl.BlockSpec((n_t, c_t), lambda i, j: (j, i))
    stat_spec = pl.BlockSpec((1, c_t), lambda i, j: (0, i))

    s, sq = pl.pallas_call(
        functools.partial(_bn2d_stats_kernel, n_total=n, mask_n=mask_n),
        out_shape=(jax.ShapeDtypeStruct((1, c), jnp.float32),
                   jax.ShapeDtypeStruct((1, c), jnp.float32)),
        grid=grid,
        in_specs=[x_spec],
        out_specs=(stat_spec, stat_spec),
        compiler_params=pltpu.CompilerParams(
            dimension_semantics=("parallel", "arbitrary"),
            vmem_limit_bytes=vmem_limit,
        ),
    )(x)

    count = float(n)
    mean = s / count
    var = jnp.maximum(sq / count - mean * mean, 0.0)
    scale = w * jax.lax.rsqrt(var + eps)                           # (1, C) f32

    return pl.pallas_call(
        _bn2d_scale_kernel,
        out_shape=jax.ShapeDtypeStruct((n, c), x.dtype),
        grid=grid,
        in_specs=[x_spec, stat_spec],
        out_specs=x_spec,
        compiler_params=pltpu.CompilerParams(
            dimension_semantics=("parallel", "parallel"),
            vmem_limit_bytes=vmem_limit,
        ),
    )(x, scale)


def batchnorm1d_scaling(x: jax.Array, weight: jax.Array | None = None,
                        eps: float = 1e-5, *,
                        vmem_block_budget_bytes: int | None = None) -> jax.Array:
    """Training-mode forward of BatchNorm1dScaling (affine=True, bias=False)."""
    assert x.ndim in (2, 3), "input must be (N, C) or (N, C, L)"
    c = x.shape[1]
    if weight is None:
        weight = jnp.ones((c,), jnp.float32)
    budget, vmem_limit = _vmem_params()
    if vmem_block_budget_bytes is not None:
        budget = vmem_block_budget_bytes
    if x.ndim == 2:
        return _bn2d(x, weight, eps, budget, vmem_limit)
    return _bn3d(x, weight, eps, budget, vmem_limit)


# ----------------------------------------------------------------------------
# Pure-JAX reference (mirrors the PyTorch forward in training mode)
# ----------------------------------------------------------------------------
def _reference(x, weight, eps=1e-5):
    if x.ndim == 2:
        axes, shape = (0,), (1, x.shape[1])
    else:
        axes, shape = (0, 2), (1, x.shape[1], 1)
    xf = x.astype(jnp.float32)
    var = jnp.var(xf, axis=axes, keepdims=True)
    out = xf / jnp.sqrt(var + eps) * weight.astype(jnp.float32).reshape(shape)
    return out.astype(x.dtype)


if __name__ == "__main__":
    key = jax.random.PRNGKey(0)
    k1, k2, k3, k4, k5 = jax.random.split(key, 5)

    # 3D (N, C, L) input; module defaults => weight = ones (reset_parameters()).
    N, C, L = 2, 4, 16
    x3 = jax.random.normal(k1, (N, C, L), dtype=jnp.float32) * 2.0 + 0.5
    w3 = jnp.ones((C,), dtype=jnp.float32)
    out3 = batchnorm1d_scaling(x3, w3, eps=1e-5)          # fused single pass
    jax.block_until_ready(out3)
    assert out3.shape == x3.shape and out3.dtype == x3.dtype
    assert jnp.allclose(out3, _reference(x3, w3), atol=1e-5, rtol=1e-5)

    # Force the two-pass (stats + scale) path: partial C edge tiles and masked
    # partial L tiles (no host-side padding anywhere).
    Nb, Cb, Lb = 3, 12, 200
    xb = jax.random.normal(k2, (Nb, Cb, Lb), dtype=jnp.float32) + 1.0
    wb = jax.random.normal(k3, (Cb,), dtype=jnp.float32)
    outb = batchnorm1d_scaling(xb, wb, eps=1e-5, vmem_block_budget_bytes=40_000)
    jax.block_until_ready(outb)
    assert outb.shape == xb.shape
    assert jnp.allclose(outb, _reference(xb, wb), atol=1e-4, rtol=1e-4)

    # 2D (N, C) fused path.
    x2 = jax.random.normal(k4, (8, 32), dtype=jnp.float32)
    w2 = jnp.ones((32,), dtype=jnp.float32)
    out2 = batchnorm1d_scaling(x2, w2, eps=1e-5)
    jax.block_until_ready(out2)
    assert jnp.allclose(out2, _reference(x2, w2), atol=1e-5, rtol=1e-5)

    # 2D two-pass path (N-tiled + masked rows, partial C edge tile).
    x2b = jax.random.normal(k5, (20, 160), dtype=jnp.float32) * 1.5 + 0.25
    w2b = jnp.linspace(0.5, 1.5, 160, dtype=jnp.float32)
    out2b = batchnorm1d_scaling(x2b, w2b, eps=1e-5, vmem_block_budget_bytes=8_192)
    jax.block_until_ready(out2b)
    assert jnp.allclose(out2b, _reference(x2b, w2b), atol=1e-4, rtol=1e-4)

    print("KERNEL_OK")
</pallas_src>

<mosaic_0001>
module attributes {stable_mosaic.version = 11 : i64} {
  func.func @_bn3d_fused_kernel(%arg0: i32, %arg1: memref<2x4x16xf32, #tpu.memory_space<vmem>>, %arg2: memref<4x1xf32, #tpu.memory_space<vmem>>, %arg3: memref<2x4x16xf32, #tpu.memory_space<vmem>>) attributes {dimension_semantics = [#tpu.dimension_semantics<parallel>], iteration_bounds = array<i64: 1>, scalar_prefetch = 0 : i64, scratch_operands = 0 : i64, tpu.core_type = #tpu.core_type<tc>, window_params = [{transform_indices = @transform_0, window_bounds = array<i64: 2, 4, 16>}, {transform_indices = @transform_1, window_bounds = array<i64: 4, 1>}, {transform_indices = @transform_2, window_bounds = array<i64: 2, 4, 16>}]} {
    %cst = arith.constant 0.000000e+00 : f32
    %0 = vector.broadcast %cst : f32 to vector<4x1xf32>
    %c0_i32 = arith.constant 0 : i32
    %1 = arith.index_cast %c0_i32 : i32 to index
    %c0 = arith.constant 0 : index
    %c0_0 = arith.constant 0 : index
    %2 = vector.load %arg1[%1, %c0, %c0_0] : memref<2x4x16xf32, #tpu.memory_space<vmem>>, vector<1x4x16xf32>
    %3 = vector.shape_cast %2 : vector<1x4x16xf32> to vector<4x16xf32>
    %cst_1 = arith.constant dense<0.000000e+00> : vector<4xf32>
    %4 = vector.multi_reduction <add>, %3, %cst_1 [1] : vector<4x16xf32> to vector<4xf32>
    %5 = vector.shape_cast %4 : vector<4xf32> to vector<4x1xf32>
    %6 = arith.addf %0, %5 : vector<4x1xf32>
    %c1_i32 = arith.constant 1 : i32
    %7 = arith.index_cast %c1_i32 : i32 to index
    %c0_2 = arith.constant 0 : index
    %c0_3 = arith.constant 0 : index
    %8 = vector.load %arg1[%7, %c0_2, %c0_3] : memref<2x4x16xf32, #tpu.memory_space<vmem>>, vector<1x4x16xf32>
    %9 = vector.shape_cast %8 : vector<1x4x16xf32> to vector<4x16xf32>
    %cst_4 = arith.constant dense<0.000000e+00> : vector<4xf32>
    %10 = vector.multi_reduction <add>, %9, %cst_4 [1] : vector<4x16xf32> to vector<4xf32>
    %11 = vector.shape_cast %10 : vector<4xf32> to vector<4x1xf32>
    %12 = arith.addf %6, %11 : vector<4x1xf32>
    %c2_i32 = arith.constant 2 : i32
    %cst_5 = arith.constant 3.125000e-02 : f32
    %13 = vector.broadcast %cst_5 : f32 to vector<4x1xf32>
    %14 = arith.mulf %12, %13 : vector<4x1xf32>
    %cst_6 = arith.constant 0.000000e+00 : f32
    %15 = vector.broadcast %cst_6 : f32 to vector<4x1xf32>
    %c0_i32_7 = arith.constant 0 : i32
    %16 = arith.index_cast %c0_i32_7 : i32 to index
    %c0_8 = arith.constant 0 : index
    %c0_9 = arith.constant 0 : index
    %17 = vector.load %arg1[%16, %c0_8, %c0_9] : memref<2x4x16xf32, #tpu.memory_space<vmem>>, vector<1x4x16xf32>
    %18 = vector.shape_cast %17 : vector<1x4x16xf32> to vector<4x16xf32>
    %19 = vector.broadcast %14 : vector<4x1xf32> to vector<4x16xf32>
    %20 = arith.subf %18, %19 : vector<4x16xf32>
    %21 = arith.mulf %20, %20 : vector<4x16xf32>
    %cst_10 = arith.constant dense<0.000000e+00> : vector<4xf32>
    %22 = vector.multi_reduction <add>, %21, %cst_10 [1] : vector<4x16xf32> to vector<4xf32>
    %23 = vector.shape_cast %22 : vector<4xf32> to vector<4x1xf32>
    %24 = arith.addf %15, %23 : vector<4x1xf32>
    %c1_i32_11 = arith.constant 1 : i32
    %25 = arith.index_cast %c1_i32_11 : i32 to index
    %c0_12 = arith.constant 0 : index
    %c0_13 = arith.constant 0 : index
    %26 = vector.load %arg1[%25, %c0_12, %c0_13] : memref<2x4x16xf32, #tpu.memory_space<vmem>>, vector<1x4x16xf32>
    %27 = vector.shape_cast %26 : vector<1x4x16xf32> to vector<4x16xf32>
    %28 = vector.broadcast %14 : vector<4x1xf32> to vector<4x16xf32>
    %29 = arith.subf %27, %28 : vector<4x16xf32>
    %30 = arith.mulf %29, %29 : vector<4x16xf32>
    %cst_14 = arith.constant dense<0.000000e+00> : vector<4xf32>
    %31 = vector.multi_reduction <add>, %30, %cst_14 [1] : vector<4x16xf32> to vector<4xf32>
    %32 = vector.shape_cast %31 : vector<4xf32> to vector<4x1xf32>
    %33 = arith.addf %24, %32 : vector<4x1xf32>
    %c2_i32_15 = arith.constant 2 : i32
    %cst_16 = arith.constant 3.125000e-02 : f32
    %34 = vector.broadcast %cst_16 : f32 to vector<4x1xf32>
    %35 = arith.mulf %33, %34 : vector<4x1xf32>
    %cst_17 = arith.constant 9.99999974E-6 : f32
    %36 = vector.broadcast %cst_17 : f32 to vector<4x1xf32>
    %37 = arith.addf %35, %36 : vector<4x1xf32>
    %38 = math.rsqrt %37 : vector<4x1xf32>
    %c0_18 = arith.constant 0 : index
    %c0_19 = arith.constant 0 : index
    %39 = vector.load %arg2[%c0_18, %c0_19] : memref<4x1xf32, #tpu.memory_space<vmem>>, vector<4x1xf32>
    %40 = arith.mulf %38, %39 : vector<4x1xf32>
    %c0_i32_20 = arith.constant 0 : i32
    %41 = arith.index_cast %c0_i32_20 : i32 to index
    %c0_21 = arith.constant 0 : index
    %c0_22 = arith.constant 0 : index
    %42 = vector.load %arg1[%41, %c0_21, %c0_22] : memref<2x4x16xf32, #tpu.memory_space<vmem>>, vector<1x4x16xf32>
    %43 = vector.shape_cast %42 : vector<1x4x16xf32> to vector<4x16xf32>
    %44 = vector.broadcast %40 : vector<4x1xf32> to vector<4x16xf32>
    %45 = arith.mulf %43, %44 : vector<4x16xf32>
    %46 = arith.index_cast %c0_i32_20 : i32 to index
    %c0_23 = arith.constant 0 : index
    %c0_24 = arith.constant 0 : index
    %47 = vector.load %arg3[%46, %c0_23, %c0_24] : memref<2x4x16xf32, #tpu.memory_space<vmem>>, vector<1x4x16xf32>
    %48 = vector.shape_cast %47 : vector<1x4x16xf32> to vector<4x16xf32>
    %49 = vector.shape_cast %45 : vector<4x16xf32> to vector<1x4x16xf32>
    tpu.vector_store %arg3[%46, %c0_23, %c0_24], %49 {strides = array<i32>} : memref<2x4x16xf32, #tpu.memory_space<vmem>>, vector<1x4x16xf32>,
    %c1_i32_25 = arith.constant 1 : i32
    %50 = arith.index_cast %c1_i32_25 : i32 to index
    %c0_26 = arith.constant 0 : index
    %c0_27 = arith.constant 0 : index
    %51 = vector.load %arg1[%50, %c0_26, %c0_27] : memref<2x4x16xf32, #tpu.memory_space<vmem>>, vector<1x4x16xf32>
    %52 = vector.shape_cast %51 : vector<1x4x16xf32> to vector<4x16xf32>
    %53 = vector.broadcast %40 : vector<4x1xf32> to vector<4x16xf32>
    %54 = arith.mulf %52, %53 : vector<4x16xf32>
    %55 = arith.index_cast %c1_i32_25 : i32 to index
    %c0_28 = arith.constant 0 : index
    %c0_29 = arith.constant 0 : index
    %56 = vector.load %arg3[%55, %c0_28, %c0_29] : memref<2x4x16xf32, #tpu.memory_space<vmem>>, vector<1x4x16xf32>
    %57 = vector.shape_cast %56 : vector<1x4x16xf32> to vector<4x16xf32>
    %58 = vector.shape_cast %54 : vector<4x16xf32> to vector<1x4x16xf32>
    tpu.vector_store %arg3[%55, %c0_28, %c0_29], %58 {strides = array<i32>} : memref<2x4x16xf32, #tpu.memory_space<vmem>>, vector<1x4x16xf32>,
    %c2_i32_30 = arith.constant 2 : i32
    return
  }
  func.func @transform_0(%arg0: i32) -> (i32, i32, i32) {
    %c0_i32 = arith.constant 0 : i32
    %c0_i32_0 = arith.constant 0 : i32
    %c0_i32_1 = arith.constant 0 : i32
    return %c0_i32, %arg0, %c0_i32_0 : i32, i32, i32
  }
  func.func @transform_1(%arg0: i32) -> (i32, i32) {
    %c0_i32 = arith.constant 0 : i32
    %c0_i32_0 = arith.constant 0 : i32
    return %arg0, %c0_i32 : i32, i32
  }
  func.func @transform_2(%arg0: i32) -> (i32, i32, i32) {
    %c0_i32 = arith.constant 0 : i32
    %c0_i32_0 = arith.constant 0 : i32
    %c0_i32_1 = arith.constant 0 : i32
    return %c0_i32, %arg0, %c0_i32_0 : i32, i32, i32
  }
}

</mosaic_0001>

<llo_original>
// kernel: tpu_custom_call.1
$region0: #{tpu_custom_call.1}
  #allocation0 [shape = 'u32[]', space=smem, size = 0x4, offset = 0x4, fixed_abs, tag = 'smem constant byte address 0x4 - core index']
  #allocation1 [shape = 'u32[144,128]{1,0:T(1,128)}', space=vmem, size = 0x12000, scoped, tag = 'internal scratch']
  %s0 = inlined_call_operand.hbm [shape: f32[2,4,16], index: 0, kind: input, shape index: {}]
  %s1 = inlined_call_operand.vmem [shape: f32[4,1], index: 1, kind: input, shape index: {}]
  %s2 = inlined_call_operand.hbm [shape: f32[2,4,16], index: 2, kind: output, shape index: {}]
  %s3 = sld [smem:[#allocation0]]
  $region22: #{tpu_custom_call.1} parent=0
    _
  %s5 = ssub.s32 1, %s3
  %s6 = scalar_select 0, %s5, %s3
  $region1: #{tpu_custom_call.1} parent=0
    #allocation2 [shape = 'u8[4096]{0}', space=vmem, size = 0x1000, scoped, tag = 'input window, operand 0, single buffered']
    #allocation3 [shape = 's32[1]{0}', space=sflag, size = 0x4, scoped, tag = 'scoped memory for tpu_custom_call.1']
    #allocation4 [shape = 's32[1]{0}', space=sflag, size = 0x4, scoped, tag = 'scoped memory for tpu_custom_call.1']
    #allocation5 [shape = 'u8[4096]{0}', space=vmem, size = 0x1000, scoped, tag = 'output window, operand 0, single buffered']
    %7 = vsyncpa [#allocation3], 0
    %8 = vsyncpa [#allocation4], 0
    // Predicated region
    $region2: #{tpu_custom_call.1} parent=1 // pred_check
      _
    $region3: #{tpu_custom_call.1} parent=1 // pred_check_branch
      %10 = sbr.rel (0) target = $region5
    $region4: #{tpu_custom_call.1} parent=1 // pred_region
      %s12 = ssub.s32 128, 128
      %13 = vsyncadd [#allocation3], %s12
      %s14 = sshll.u32 [#allocation2], 4
      %s15 = int_to_ptr.vmem [resolvable:$true] %s14
      %20 = dma.hbm_to_vmem [thread:$0]  %s0, 128, %s15, [#allocation3], 64, 64, 4
    $region5: #{tpu_custom_call.1} parent=1 // pred_fallthru
      _
    // Predicated region
    $region6: #{tpu_custom_call.1} parent=1 // pred_check
      _
    $region7: #{tpu_custom_call.1} parent=1 // pred_check_branch
      %22 = sbr.rel (0) target = $region9
    $region8: #{tpu_custom_call.1} parent=1 // pred_region
      _
    $region9: #{tpu_custom_call.1} parent=1 // pred_fallthru
      _
    // Predicated region
    $region10: #{tpu_custom_call.1} parent=1 // pred_check
      _
    $region11: #{tpu_custom_call.1} parent=1 // pred_check_branch
      %24 = sbr.rel (0) target = $region13
    $region12: #{tpu_custom_call.1} parent=1 // pred_region
      %25 = dma.done [#allocation3], 128
    $region13: #{tpu_custom_call.1} parent=1 // pred_fallthru
      _
    %v26 = vld [vmem:[#allocation2] sm:$0xf]
    %vm27 = vcmask 125952
    %v28 = vsel %vm27, %v26, 0.0
    %29 = vadd.xlane.f32.xlu0 %v28
    %v30 = vpop.xlane.xlu0 %29
    %v31 = vadd.f32 %v30, 0.0
    %s32 = scalar_lea.vmem [#allocation2], 4
    %v33 = vld [vmem:[%s32] sm:$0xf]
    %v34 = vsel %vm27, %v33, 0.0
    %35 = vadd.xlane.f32.xlu0 %v34
    %v36 = vpop.xlane.xlu0 %35
    %v37 = vadd.f32 %v31, %v36
    %v38 = vmul.f32 %v37, 0.03125
    %v39 = vsub.f32 %v26, %v38
    %v40 = vmul.f32 %v39, %v39
    %v41 = vsel %vm27, %v40, 0.0
    %42 = vadd.xlane.f32.xlu0 %v41
    %v43 = vpop.xlane.xlu0 %42
    %v44 = vadd.f32 %v43, 0.0
    %v45 = vsub.f32 %v33, %v38
    %v46 = vmul.f32 %v45, %v45
    %v47 = vsel %vm27, %v46, 0.0
    %48 = vadd.xlane.f32.xlu0 %v47
    %v49 = vpop.xlane.xlu0 %48
    %v50 = vadd.f32 %v44, %v49
    %v51 = vmul.f32 %v50, 0.03125
    %v52 = vadd.f32 %v51, 1e-05
    %v53 = vrsqrt.pop %v52
    %v54 = vld [vmem:[%s1] sm:$0xf]
    %v55 = vmul.f32 %v53, %v54
    %57 = vset.pattern.permute.xlu0 0
    %58 = vperm.xlu0 %57, %v55
    %v59 = vpop.permute.xlu0 %58
    %v61 = vmul.f32 %v26, %v59
    %62 = vst.msk [vmem:[#allocation5] sm:$0xf] %vm27, %v61
    %v63 = vld [vmem:[%s32] sm:$0xf]
    %v64 = vmul.f32 %v63, %v59
    %s65 = scalar_lea.vmem [#allocation5], 4
    %66 = vst.msk [vmem:[%s65] sm:$0xf] %vm27, %v64
    // Predicated region
    $region14: #{tpu_custom_call.1} parent=1 // pred_check
      _
    $region15: #{tpu_custom_call.1} parent=1 // pred_check_branch
      %68 = sbr.rel (0) target = $region17
    $region16: #{tpu_custom_call.1} parent=1 // pred_region
      %s70 = ssub.s32 128, 128
      %71 = vsyncadd [#allocation4], %s70
      %s72 = sshll.u32 [#allocation5], 4
      %s73 = int_to_ptr.vmem [resolvable:$true] %s72
      %78 = dma.vmem_to_hbm [thread:$0]  %s73, 128, %s2, [#allocation4], 64, 64, 4
    $region17: #{tpu_custom_call.1} parent=1 // pred_fallthru
      _
    // Predicated region
    $region18: #{tpu_custom_call.1} parent=1 // pred_check
      _
    $region19: #{tpu_custom_call.1} parent=1 // pred_check_branch
      %80 = sbr.rel (0) target = $region21
    $region20: #{tpu_custom_call.1} parent=1 // pred_region
      %81 = dma.done [#allocation4], 128
    $region21: #{tpu_custom_call.1} parent=1 // pred_fallthru
      _
    %82 = vsyncpa [#allocation3], 1
    %83 = vsyncpa [#allocation4], 1

</llo_original>
